<compile_context>
chip_gen: v7x
topology: tpu7x:2x2x1
jax: 0.10.0
libtpu: 0.0.40
codegen_flags: <defaults>
</compile_context>

<pallas_src>
import jax
import jax.numpy as jnp
from jax.experimental import pallas as pl
from jax.experimental.pallas import tpu as pltpu


def _ppr_exact_kernel(idx_ref, preds_ref, mat_hbm, out_ref,
                      rows_vmem, copy_sems, acc_ref):
    """out = mat[idx] @ predictions, fused gather + tiled matmul.

    idx_ref   : SMEM  (B_pad,) int32        -- scalar-prefetched gather indices
    preds_ref : VMEM  (tk, C)               -- current predictions tile (auto-pipelined)
    mat_hbm   : ANY   (N, N)                -- dense PPR matrix, left in HBM
    out_ref   : VMEM  (B_pad, C)            -- final result (written on last step)
    rows_vmem : VMEM  (2, B_pad, tk)        -- double-buffered gathered row slices
    copy_sems : DMA sems (2, B_pad)         -- one per row per buffer slot
    acc_ref   : VMEM  (B_pad, C) f32        -- accumulator, persists across grid
    """
    k = pl.program_id(0)
    nk = pl.num_programs(0)
    b_pad = rows_vmem.shape[1]
    tk = rows_vmem.shape[2]

    def gather(kk, slot):
        # One small contiguous DMA per gathered row: mat[idx[b], kk*tk : (kk+1)*tk].
        col0 = pl.multiple_of(kk * tk, tk)
        for b in range(b_pad):
            pltpu.make_async_copy(
                mat_hbm.at[pl.ds(idx_ref[b], 1), pl.ds(col0, tk)],
                rows_vmem.at[slot, pl.ds(b, 1), :],
                copy_sems.at[slot, b],
            ).start()

    def wait_slot(slot):
        for b in range(b_pad):
            pltpu.make_async_copy(
                mat_hbm.at[pl.ds(0, 1), pl.ds(0, tk)],      # dummy src, shapes/sem match
                rows_vmem.at[slot, pl.ds(b, 1), :],
                copy_sems.at[slot, b],
            ).wait()

    slot = k & 1

    @pl.when(k == 0)
    def _():
        acc_ref[...] = jnp.zeros_like(acc_ref)
        gather(0, 0)                                        # prime slot 0

    wait_slot(slot)

    @pl.when(k + 1 < nk)
    def _():
        gather(k + 1, 1 - slot)                             # prefetch next tile

    # MXU matmul on the current tile, f32 accumulation.
    acc_ref[...] += jnp.dot(
        rows_vmem[slot], preds_ref[...], preferred_element_type=jnp.float32
    )

    @pl.when(k == nk - 1)
    def _():
        out_ref[...] = acc_ref[...].astype(out_ref.dtype)


def _pick_tk(n):
    """Largest multiple-of-128 divisor of n up to 2048, else n itself (small graphs)."""
    for cand in (2048, 1024, 512, 256, 128):
        if n % cand == 0:
            return cand
    return n


def ppr_exact_forward(mat, predictions, idx):
    """PPRExact.forward(predictions, idx) = mat[idx] @ predictions (drop_prob=None)."""
    # TODO(synk): MixedDropout (drop_prob > 0) not implemented; module default drop_prob=None.
    n, c = predictions.shape
    assert mat.shape == (n, n)
    b = idx.shape[0]
    b_pad = ((b + 7) // 8) * 8                     # pad gathered-row count to a sublane multiple
    idx_padded = jnp.zeros((b_pad,), jnp.int32).at[:b].set(idx.astype(jnp.int32))

    tk = _pick_tk(n)
    nk = n // tk

    out = pl.pallas_call(
        _ppr_exact_kernel,
        out_shape=jax.ShapeDtypeStruct((b_pad, c), predictions.dtype),
        grid_spec=pltpu.PrefetchScalarGridSpec(
            num_scalar_prefetch=1,
            grid=(nk,),
            in_specs=[
                # predictions: (tk, C) tile along the contraction axis, auto-pipelined.
                pl.BlockSpec((tk, c), lambda k, idx_ref: (k, 0)),
                # mat: left in HBM; row slices gathered manually with async DMAs.
                pl.BlockSpec(memory_space=pl.ANY),
            ],
            out_specs=pl.BlockSpec((b_pad, c), lambda k, idx_ref: (0, 0)),
            scratch_shapes=[
                pltpu.VMEM((2, b_pad, tk), mat.dtype),       # double-buffered gathered rows
                pltpu.SemaphoreType.DMA((2, b_pad)),         # per-row, per-slot DMA sems
                pltpu.VMEM((b_pad, c), jnp.float32),         # f32 accumulator
            ],
        ),
        compiler_params=pltpu.CompilerParams(
            dimension_semantics=("arbitrary",),
        ),
    )(idx_padded, predictions, mat)
    return out[:b]


def calc_a_hat(adj):
    """Dense A_hat = (A + I) @ diag(1 / rowsum(A + I))."""
    n = adj.shape[0]
    a = adj + jnp.eye(n, dtype=adj.dtype)
    d_vec = jnp.sum(a, axis=1)
    return a * (1.0 / d_vec)[None, :]              # right-multiply by diag: scales columns


def calc_ppr_exact(adj, alpha):
    """Module-buffer precompute: mat = alpha * inv(I - (1 - alpha) * A_hat)."""
    n = adj.shape[0]
    m = calc_a_hat(adj)
    a_inner = jnp.eye(n, dtype=jnp.float32) - (1.0 - alpha) * m
    return alpha * jnp.linalg.inv(a_inner)


if __name__ == "__main__":
    key = jax.random.PRNGKey(0)
    k_adj, k_pred = jax.random.split(key)

    N = 256      # number of nodes
    C = 128      # prediction width (classes) — lane-dense
    alpha = 0.1

    # Deterministic synthetic symmetric 0/1 adjacency (no self loops).
    upper = (jax.random.uniform(k_adj, (N, N)) < 0.05).astype(jnp.float32)
    adj = jnp.triu(upper, k=1)
    adj = adj + adj.T

    mat = calc_ppr_exact(adj, alpha)                                  # [N, N] module buffer
    predictions = jax.random.normal(k_pred, (N, C), jnp.float32)      # [N, C]
    idx = jnp.array([0, 3, 17, 42, 100, 200, 255], dtype=jnp.int32)   # [B]

    out = ppr_exact_forward(mat, predictions, idx)
    out = jax.block_until_ready(out)

    # Pure-JAX reference (high-precision matmul) for correctness.
    ref = jnp.matmul(mat[idx], predictions, precision=jax.lax.Precision.HIGHEST)

    assert out.shape == (idx.shape[0], C)
    assert jnp.allclose(out, ref, atol=1e-3, rtol=1e-3), "mismatch vs reference"

    print("KERNEL_OK")
</pallas_src>

<mosaic_0001>
module attributes {stable_mosaic.version = 11 : i64} {
  func.func @_ppr_exact_kernel(%arg0: i32, %arg1: memref<8xi32, #tpu.memory_space<smem>>, %arg2: memref<256x128xf32, #tpu.memory_space<vmem>>, %arg3: memref<256x256xf32, #tpu.memory_space<any>>, %arg4: memref<8x128xf32, #tpu.memory_space<vmem>>, %arg5: memref<2x8x256xf32, #tpu.memory_space<vmem>>, %arg6: memref<2x8x!tpu.dma_semaphore, #tpu.memory_space<semaphore_mem>>, %arg7: memref<8x128xf32, #tpu.memory_space<vmem>>) attributes {dimension_semantics = [#tpu.dimension_semantics<arbitrary>], iteration_bounds = array<i64: 1>, scalar_prefetch = 1 : i64, scratch_operands = 3 : i64, tpu.core_type = #tpu.core_type<tc>, window_params = [{transform_indices = @transform_0, window_bounds = array<i64: 256, 128>}, {}, {pipeline_mode = #tpu.pipeline_mode<synchronous>, transform_indices = @transform_2, window_bounds = array<i64: 8, 128>}]} {
    %c1_i32 = arith.constant 1 : i32
    %0 = arith.andi %arg0, %c1_i32 : i32
    %c0_i32 = arith.constant 0 : i32
    %1 = arith.cmpi eq, %arg0, %c0_i32 : i32
    %2 = arith.extui %1 : i1 to i32
    %c0_i32_0 = arith.constant 0 : i32
    %3 = arith.cmpi ne, %2, %c0_i32_0 : i32
    scf.if %3 {
      %cst_47 = arith.constant 0.000000e+00 : f32
      %59 = vector.broadcast %cst_47 : f32 to vector<8x128xf32>
      %c0_48 = arith.constant 0 : index
      %c0_49 = arith.constant 0 : index
      %60 = vector.load %arg7[%c0_48, %c0_49] : memref<8x128xf32, #tpu.memory_space<vmem>>, vector<8x128xf32>
      tpu.vector_store %arg7[%c0_48, %c0_49], %59 {strides = array<i32>} : memref<8x128xf32, #tpu.memory_space<vmem>>, vector<8x128xf32>,
      %c0_i32_50 = arith.constant 0 : i32
      %61 = tpu.assume_multiple %c0_i32_50, 256 : i32
      %c0_51 = arith.constant 0 : index
      %62 = memref.load %arg1[%c0_51] : memref<8xi32, #tpu.memory_space<smem>>
      %c0_i32_52 = arith.constant 0 : i32
      %c0_i32_53 = arith.constant 0 : i32
      %c0_i32_54 = arith.constant 0 : i32
      %63 = tpu.memref_slice %arg3[%62, %61] : memref<256x256xf32, #tpu.memory_space<any>> -> memref<1x256xf32, #tpu.memory_space<any>>
      %c0_i32_55 = arith.constant 0 : i32
      %c0_i32_56 = arith.constant 0 : i32
      %64 = tpu.memref_slice %arg5[%c0_i32_52, %c0_i32_55, %c0_i32_56] : memref<2x8x256xf32, #tpu.memory_space<vmem>> -> memref<1x1x256xf32, #tpu.memory_space<vmem>>
      %65 = tpu.memref_squeeze %64 : memref<1x1x256xf32, #tpu.memory_space<vmem>> -> memref<1x256xf32, #tpu.memory_space<vmem>>
      %66 = tpu.memref_slice %arg6[%c0_i32_53, %c0_i32_54] : memref<2x8x!tpu.dma_semaphore, #tpu.memory_space<semaphore_mem>> -> memref<1x1x!tpu.dma_semaphore, #tpu.memory_space<semaphore_mem>>
      %67 = tpu.memref_squeeze %66 : memref<1x1x!tpu.dma_semaphore, #tpu.memory_space<semaphore_mem>> -> memref<!tpu.dma_semaphore, #tpu.memory_space<semaphore_mem>>
      tpu.enqueue_dma source(%63 : memref<1x256xf32, #tpu.memory_space<any>>) target(%65 : memref<1x256xf32, #tpu.memory_space<vmem>>) target_semaphore(%67 : memref<!tpu.dma_semaphore, #tpu.memory_space<semaphore_mem>>)
      %c1 = arith.constant 1 : index
      %68 = memref.load %arg1[%c1] : memref<8xi32, #tpu.memory_space<smem>>
      %c0_i32_57 = arith.constant 0 : i32
      %c0_i32_58 = arith.constant 0 : i32
      %c1_i32_59 = arith.constant 1 : i32
      %69 = tpu.memref_slice %arg3[%68, %61] : memref<256x256xf32, #tpu.memory_space<any>> -> memref<1x256xf32, #tpu.memory_space<any>>
      %c1_i32_60 = arith.constant 1 : i32
      %c0_i32_61 = arith.constant 0 : i32
      %70 = tpu.memref_slice %arg5[%c0_i32_57, %c1_i32_60, %c0_i32_61] : memref<2x8x256xf32, #tpu.memory_space<vmem>> -> memref<1x1x256xf32, #tpu.memory_space<vmem>>
      %71 = tpu.memref_squeeze %70 : memref<1x1x256xf32, #tpu.memory_space<vmem>> -> memref<1x256xf32, #tpu.memory_space<vmem>>
      %72 = tpu.memref_slice %arg6[%c0_i32_58, %c1_i32_59] : memref<2x8x!tpu.dma_semaphore, #tpu.memory_space<semaphore_mem>> -> memref<1x1x!tpu.dma_semaphore, #tpu.memory_space<semaphore_mem>>
      %73 = tpu.memref_squeeze %72 : memref<1x1x!tpu.dma_semaphore, #tpu.memory_space<semaphore_mem>> -> memref<!tpu.dma_semaphore, #tpu.memory_space<semaphore_mem>>
      tpu.enqueue_dma source(%69 : memref<1x256xf32, #tpu.memory_space<any>>) target(%71 : memref<1x256xf32, #tpu.memory_space<vmem>>) target_semaphore(%73 : memref<!tpu.dma_semaphore, #tpu.memory_space<semaphore_mem>>)
      %c2 = arith.constant 2 : index
      %74 = memref.load %arg1[%c2] : memref<8xi32, #tpu.memory_space<smem>>
      %c0_i32_62 = arith.constant 0 : i32
      %c0_i32_63 = arith.constant 0 : i32
      %c2_i32_64 = arith.constant 2 : i32
      %75 = tpu.memref_slice %arg3[%74, %61] : memref<256x256xf32, #tpu.memory_space<any>> -> memref<1x256xf32, #tpu.memory_space<any>>
      %c2_i32_65 = arith.constant 2 : i32
      %c0_i32_66 = arith.constant 0 : i32
      %76 = tpu.memref_slice %arg5[%c0_i32_62, %c2_i32_65, %c0_i32_66] : memref<2x8x256xf32, #tpu.memory_space<vmem>> -> memref<1x1x256xf32, #tpu.memory_space<vmem>>
      %77 = tpu.memref_squeeze %76 : memref<1x1x256xf32, #tpu.memory_space<vmem>> -> memref<1x256xf32, #tpu.memory_space<vmem>>
      %78 = tpu.memref_slice %arg6[%c0_i32_63, %c2_i32_64] : memref<2x8x!tpu.dma_semaphore, #tpu.memory_space<semaphore_mem>> -> memref<1x1x!tpu.dma_semaphore, #tpu.memory_space<semaphore_mem>>
      %79 = tpu.memref_squeeze %78 : memref<1x1x!tpu.dma_semaphore, #tpu.memory_space<semaphore_mem>> -> memref<!tpu.dma_semaphore, #tpu.memory_space<semaphore_mem>>
      tpu.enqueue_dma source(%75 : memref<1x256xf32, #tpu.memory_space<any>>) target(%77 : memref<1x256xf32, #tpu.memory_space<vmem>>) target_semaphore(%79 : memref<!tpu.dma_semaphore, #tpu.memory_space<semaphore_mem>>)
      %c3 = arith.constant 3 : index
      %80 = memref.load %arg1[%c3] : memref<8xi32, #tpu.memory_space<smem>>
      %c0_i32_67 = arith.constant 0 : i32
      %c0_i32_68 = arith.constant 0 : i32
      %c3_i32_69 = arith.constant 3 : i32
      %81 = tpu.memref_slice %arg3[%80, %61] : memref<256x256xf32, #tpu.memory_space<any>> -> memref<1x256xf32, #tpu.memory_space<any>>
      %c3_i32_70 = arith.constant 3 : i32
      %c0_i32_71 = arith.constant 0 : i32
      %82 = tpu.memref_slice %arg5[%c0_i32_67, %c3_i32_70, %c0_i32_71] : memref<2x8x256xf32, #tpu.memory_space<vmem>> -> memref<1x1x256xf32, #tpu.memory_space<vmem>>
      %83 = tpu.memref_squeeze %82 : memref<1x1x256xf32, #tpu.memory_space<vmem>> -> memref<1x256xf32, #tpu.memory_space<vmem>>
      %84 = tpu.memref_slice %arg6[%c0_i32_68, %c3_i32_69] : memref<2x8x!tpu.dma_semaphore, #tpu.memory_space<semaphore_mem>> -> memref<1x1x!tpu.dma_semaphore, #tpu.memory_space<semaphore_mem>>
      %85 = tpu.memref_squeeze %84 : memref<1x1x!tpu.dma_semaphore, #tpu.memory_space<semaphore_mem>> -> memref<!tpu.dma_semaphore, #tpu.memory_space<semaphore_mem>>
      tpu.enqueue_dma source(%81 : memref<1x256xf32, #tpu.memory_space<any>>) target(%83 : memref<1x256xf32, #tpu.memory_space<vmem>>) target_semaphore(%85 : memref<!tpu.dma_semaphore, #tpu.memory_space<semaphore_mem>>)
      %c4 = arith.constant 4 : index
      %86 = memref.load %arg1[%c4] : memref<8xi32, #tpu.memory_space<smem>>
      %c0_i32_72 = arith.constant 0 : i32
      %c0_i32_73 = arith.constant 0 : i32
      %c4_i32_74 = arith.constant 4 : i32
      %87 = tpu.memref_slice %arg3[%86, %61] : memref<256x256xf32, #tpu.memory_space<any>> -> memref<1x256xf32, #tpu.memory_space<any>>
      %c4_i32_75 = arith.constant 4 : i32
      %c0_i32_76 = arith.constant 0 : i32
      %88 = tpu.memref_slice %arg5[%c0_i32_72, %c4_i32_75, %c0_i32_76] : memref<2x8x256xf32, #tpu.memory_space<vmem>> -> memref<1x1x256xf32, #tpu.memory_space<vmem>>
      %89 = tpu.memref_squeeze %88 : memref<1x1x256xf32, #tpu.memory_space<vmem>> -> memref<1x256xf32, #tpu.memory_space<vmem>>
      %90 = tpu.memref_slice %arg6[%c0_i32_73, %c4_i32_74] : memref<2x8x!tpu.dma_semaphore, #tpu.memory_space<semaphore_mem>> -> memref<1x1x!tpu.dma_semaphore, #tpu.memory_space<semaphore_mem>>
      %91 = tpu.memref_squeeze %90 : memref<1x1x!tpu.dma_semaphore, #tpu.memory_space<semaphore_mem>> -> memref<!tpu.dma_semaphore, #tpu.memory_space<semaphore_mem>>
      tpu.enqueue_dma source(%87 : memref<1x256xf32, #tpu.memory_space<any>>) target(%89 : memref<1x256xf32, #tpu.memory_space<vmem>>) target_semaphore(%91 : memref<!tpu.dma_semaphore, #tpu.memory_space<semaphore_mem>>)
      %c5 = arith.constant 5 : index
      %92 = memref.load %arg1[%c5] : memref<8xi32, #tpu.memory_space<smem>>
      %c0_i32_77 = arith.constant 0 : i32
      %c0_i32_78 = arith.constant 0 : i32
      %c5_i32_79 = arith.constant 5 : i32
      %93 = tpu.memref_slice %arg3[%92, %61] : memref<256x256xf32, #tpu.memory_space<any>> -> memref<1x256xf32, #tpu.memory_space<any>>
      %c5_i32_80 = arith.constant 5 : i32
      %c0_i32_81 = arith.constant 0 : i32
      %94 = tpu.memref_slice %arg5[%c0_i32_77, %c5_i32_80, %c0_i32_81] : memref<2x8x256xf32, #tpu.memory_space<vmem>> -> memref<1x1x256xf32, #tpu.memory_space<vmem>>
      %95 = tpu.memref_squeeze %94 : memref<1x1x256xf32, #tpu.memory_space<vmem>> -> memref<1x256xf32, #tpu.memory_space<vmem>>
      %96 = tpu.memref_slice %arg6[%c0_i32_78, %c5_i32_79] : memref<2x8x!tpu.dma_semaphore, #tpu.memory_space<semaphore_mem>> -> memref<1x1x!tpu.dma_semaphore, #tpu.memory_space<semaphore_mem>>
      %97 = tpu.memref_squeeze %96 : memref<1x1x!tpu.dma_semaphore, #tpu.memory_space<semaphore_mem>> -> memref<!tpu.dma_semaphore, #tpu.memory_space<semaphore_mem>>
      tpu.enqueue_dma source(%93 : memref<1x256xf32, #tpu.memory_space<any>>) target(%95 : memref<1x256xf32, #tpu.memory_space<vmem>>) target_semaphore(%97 : memref<!tpu.dma_semaphore, #tpu.memory_space<semaphore_mem>>)
      %c6 = arith.constant 6 : index
      %98 = memref.load %arg1[%c6] : memref<8xi32, #tpu.memory_space<smem>>
      %c0_i32_82 = arith.constant 0 : i32
      %c0_i32_83 = arith.constant 0 : i32
      %c6_i32_84 = arith.constant 6 : i32
      %99 = tpu.memref_slice %arg3[%98, %61] : memref<256x256xf32, #tpu.memory_space<any>> -> memref<1x256xf32, #tpu.memory_space<any>>
      %c6_i32_85 = arith.constant 6 : i32
      %c0_i32_86 = arith.constant 0 : i32
      %100 = tpu.memref_slice %arg5[%c0_i32_82, %c6_i32_85, %c0_i32_86] : memref<2x8x256xf32, #tpu.memory_space<vmem>> -> memref<1x1x256xf32, #tpu.memory_space<vmem>>
      %101 = tpu.memref_squeeze %100 : memref<1x1x256xf32, #tpu.memory_space<vmem>> -> memref<1x256xf32, #tpu.memory_space<vmem>>
      %102 = tpu.memref_slice %arg6[%c0_i32_83, %c6_i32_84] : memref<2x8x!tpu.dma_semaphore, #tpu.memory_space<semaphore_mem>> -> memref<1x1x!tpu.dma_semaphore, #tpu.memory_space<semaphore_mem>>
      %103 = tpu.memref_squeeze %102 : memref<1x1x!tpu.dma_semaphore, #tpu.memory_space<semaphore_mem>> -> memref<!tpu.dma_semaphore, #tpu.memory_space<semaphore_mem>>
      tpu.enqueue_dma source(%99 : memref<1x256xf32, #tpu.memory_space<any>>) target(%101 : memref<1x256xf32, #tpu.memory_space<vmem>>) target_semaphore(%103 : memref<!tpu.dma_semaphore, #tpu.memory_space<semaphore_mem>>)
      %c7 = arith.constant 7 : index
      %104 = memref.load %arg1[%c7] : memref<8xi32, #tpu.memory_space<smem>>
      %c0_i32_87 = arith.constant 0 : i32
      %c0_i32_88 = arith.constant 0 : i32
      %c7_i32_89 = arith.constant 7 : i32
      %105 = tpu.memref_slice %arg3[%104, %61] : memref<256x256xf32, #tpu.memory_space<any>> -> memref<1x256xf32, #tpu.memory_space<any>>
      %c7_i32_90 = arith.constant 7 : i32
      %c0_i32_91 = arith.constant 0 : i32
      %106 = tpu.memref_slice %arg5[%c0_i32_87, %c7_i32_90, %c0_i32_91] : memref<2x8x256xf32, #tpu.memory_space<vmem>> -> memref<1x1x256xf32, #tpu.memory_space<vmem>>
      %107 = tpu.memref_squeeze %106 : memref<1x1x256xf32, #tpu.memory_space<vmem>> -> memref<1x256xf32, #tpu.memory_space<vmem>>
      %108 = tpu.memref_slice %arg6[%c0_i32_88, %c7_i32_89] : memref<2x8x!tpu.dma_semaphore, #tpu.memory_space<semaphore_mem>> -> memref<1x1x!tpu.dma_semaphore, #tpu.memory_space<semaphore_mem>>
      %109 = tpu.memref_squeeze %108 : memref<1x1x!tpu.dma_semaphore, #tpu.memory_space<semaphore_mem>> -> memref<!tpu.dma_semaphore, #tpu.memory_space<semaphore_mem>>
      tpu.enqueue_dma source(%105 : memref<1x256xf32, #tpu.memory_space<any>>) target(%107 : memref<1x256xf32, #tpu.memory_space<vmem>>) target_semaphore(%109 : memref<!tpu.dma_semaphore, #tpu.memory_space<semaphore_mem>>)
    } else {
    }
    %c0_i32_1 = arith.constant 0 : i32
    %c0_i32_2 = arith.constant 0 : i32
    %c0_i32_3 = arith.constant 0 : i32
    %4 = tpu.memref_slice %arg3[%c0_i32_2, %c0_i32_3] : memref<256x256xf32, #tpu.memory_space<any>> -> memref<1x256xf32, #tpu.memory_space<any>>
    %c0_i32_4 = arith.constant 0 : i32
    %c0_i32_5 = arith.constant 0 : i32
    %5 = tpu.memref_slice %arg5[%0, %c0_i32_4, %c0_i32_5] : memref<2x8x256xf32, #tpu.memory_space<vmem>> -> memref<1x1x256xf32, #tpu.memory_space<vmem>>
    %6 = tpu.memref_squeeze %5 : memref<1x1x256xf32, #tpu.memory_space<vmem>> -> memref<1x256xf32, #tpu.memory_space<vmem>>
    %7 = tpu.memref_slice %arg6[%0, %c0_i32_1] : memref<2x8x!tpu.dma_semaphore, #tpu.memory_space<semaphore_mem>> -> memref<1x1x!tpu.dma_semaphore, #tpu.memory_space<semaphore_mem>>
    %8 = tpu.memref_squeeze %7 : memref<1x1x!tpu.dma_semaphore, #tpu.memory_space<semaphore_mem>> -> memref<!tpu.dma_semaphore, #tpu.memory_space<semaphore_mem>>
    tpu.wait_dma2 semaphore(%8 : memref<!tpu.dma_semaphore, #tpu.memory_space<semaphore_mem>>) src(%4 : memref<1x256xf32, #tpu.memory_space<any>>) dst(%6 : memref<1x256xf32, #tpu.memory_space<vmem>>)
    %c1_i32_6 = arith.constant 1 : i32
    %c0_i32_7 = arith.constant 0 : i32
    %c0_i32_8 = arith.constant 0 : i32
    %9 = tpu.memref_slice %arg3[%c0_i32_7, %c0_i32_8] : memref<256x256xf32, #tpu.memory_space<any>> -> memref<1x256xf32, #tpu.memory_space<any>>
    %c1_i32_9 = arith.constant 1 : i32
    %c0_i32_10 = arith.constant 0 : i32
    %10 = tpu.memref_slice %arg5[%0, %c1_i32_9, %c0_i32_10] : memref<2x8x256xf32, #tpu.memory_space<vmem>> -> memref<1x1x256xf32, #tpu.memory_space<vmem>>
    %11 = tpu.memref_squeeze %10 : memref<1x1x256xf32, #tpu.memory_space<vmem>> -> memref<1x256xf32, #tpu.memory_space<vmem>>
    %12 = tpu.memref_slice %arg6[%0, %c1_i32_6] : memref<2x8x!tpu.dma_semaphore, #tpu.memory_space<semaphore_mem>> -> memref<1x1x!tpu.dma_semaphore, #tpu.memory_space<semaphore_mem>>
    %13 = tpu.memref_squeeze %12 : memref<1x1x!tpu.dma_semaphore, #tpu.memory_space<semaphore_mem>> -> memref<!tpu.dma_semaphore, #tpu.memory_space<semaphore_mem>>
    tpu.wait_dma2 semaphore(%13 : memref<!tpu.dma_semaphore, #tpu.memory_space<semaphore_mem>>) src(%9 : memref<1x256xf32, #tpu.memory_space<any>>) dst(%11 : memref<1x256xf32, #tpu.memory_space<vmem>>)
    %c2_i32 = arith.constant 2 : i32
    %c0_i32_11 = arith.constant 0 : i32
    %c0_i32_12 = arith.constant 0 : i32
    %14 = tpu.memref_slice %arg3[%c0_i32_11, %c0_i32_12] : memref<256x256xf32, #tpu.memory_space<any>> -> memref<1x256xf32, #tpu.memory_space<any>>
    %c2_i32_13 = arith.constant 2 : i32
    %c0_i32_14 = arith.constant 0 : i32
    %15 = tpu.memref_slice %arg5[%0, %c2_i32_13, %c0_i32_14] : memref<2x8x256xf32, #tpu.memory_space<vmem>> -> memref<1x1x256xf32, #tpu.memory_space<vmem>>
    %16 = tpu.memref_squeeze %15 : memref<1x1x256xf32, #tpu.memory_space<vmem>> -> memref<1x256xf32, #tpu.memory_space<vmem>>
    %17 = tpu.memref_slice %arg6[%0, %c2_i32] : memref<2x8x!tpu.dma_semaphore, #tpu.memory_space<semaphore_mem>> -> memref<1x1x!tpu.dma_semaphore, #tpu.memory_space<semaphore_mem>>
    %18 = tpu.memref_squeeze %17 : memref<1x1x!tpu.dma_semaphore, #tpu.memory_space<semaphore_mem>> -> memref<!tpu.dma_semaphore, #tpu.memory_space<semaphore_mem>>
    tpu.wait_dma2 semaphore(%18 : memref<!tpu.dma_semaphore, #tpu.memory_space<semaphore_mem>>) src(%14 : memref<1x256xf32, #tpu.memory_space<any>>) dst(%16 : memref<1x256xf32, #tpu.memory_space<vmem>>)
    %c3_i32 = arith.constant 3 : i32
    %c0_i32_15 = arith.constant 0 : i32
    %c0_i32_16 = arith.constant 0 : i32
    %19 = tpu.memref_slice %arg3[%c0_i32_15, %c0_i32_16] : memref<256x256xf32, #tpu.memory_space<any>> -> memref<1x256xf32, #tpu.memory_space<any>>
    %c3_i32_17 = arith.constant 3 : i32
    %c0_i32_18 = arith.constant 0 : i32
    %20 = tpu.memref_slice %arg5[%0, %c3_i32_17, %c0_i32_18] : memref<2x8x256xf32, #tpu.memory_space<vmem>> -> memref<1x1x256xf32, #tpu.memory_space<vmem>>
    %21 = tpu.memref_squeeze %20 : memref<1x1x256xf32, #tpu.memory_space<vmem>> -> memref<1x256xf32, #tpu.memory_space<vmem>>
    %22 = tpu.memref_slice %arg6[%0, %c3_i32] : memref<2x8x!tpu.dma_semaphore, #tpu.memory_space<semaphore_mem>> -> memref<1x1x!tpu.dma_semaphore, #tpu.memory_space<semaphore_mem>>
    %23 = tpu.memref_squeeze %22 : memref<1x1x!tpu.dma_semaphore, #tpu.memory_space<semaphore_mem>> -> memref<!tpu.dma_semaphore, #tpu.memory_space<semaphore_mem>>
    tpu.wait_dma2 semaphore(%23 : memref<!tpu.dma_semaphore, #tpu.memory_space<semaphore_mem>>) src(%19 : memref<1x256xf32, #tpu.memory_space<any>>) dst(%21 : memref<1x256xf32, #tpu.memory_space<vmem>>)
    %c4_i32 = arith.constant 4 : i32
    %c0_i32_19 = arith.constant 0 : i32
    %c0_i32_20 = arith.constant 0 : i32
    %24 = tpu.memref_slice %arg3[%c0_i32_19, %c0_i32_20] : memref<256x256xf32, #tpu.memory_space<any>> -> memref<1x256xf32, #tpu.memory_space<any>>
    %c4_i32_21 = arith.constant 4 : i32
    %c0_i32_22 = arith.constant 0 : i32
    %25 = tpu.memref_slice %arg5[%0, %c4_i32_21, %c0_i32_22] : memref<2x8x256xf32, #tpu.memory_space<vmem>> -> memref<1x1x256xf32, #tpu.memory_space<vmem>>
    %26 = tpu.memref_squeeze %25 : memref<1x1x256xf32, #tpu.memory_space<vmem>> -> memref<1x256xf32, #tpu.memory_space<vmem>>
    %27 = tpu.memref_slice %arg6[%0, %c4_i32] : memref<2x8x!tpu.dma_semaphore, #tpu.memory_space<semaphore_mem>> -> memref<1x1x!tpu.dma_semaphore, #tpu.memory_space<semaphore_mem>>
    %28 = tpu.memref_squeeze %27 : memref<1x1x!tpu.dma_semaphore, #tpu.memory_space<semaphore_mem>> -> memref<!tpu.dma_semaphore, #tpu.memory_space<semaphore_mem>>
    tpu.wait_dma2 semaphore(%28 : memref<!tpu.dma_semaphore, #tpu.memory_space<semaphore_mem>>) src(%24 : memref<1x256xf32, #tpu.memory_space<any>>) dst(%26 : memref<1x256xf32, #tpu.memory_space<vmem>>)
    %c5_i32 = arith.constant 5 : i32
    %c0_i32_23 = arith.constant 0 : i32
    %c0_i32_24 = arith.constant 0 : i32
    %29 = tpu.memref_slice %arg3[%c0_i32_23, %c0_i32_24] : memref<256x256xf32, #tpu.memory_space<any>> -> memref<1x256xf32, #tpu.memory_space<any>>
    %c5_i32_25 = arith.constant 5 : i32
    %c0_i32_26 = arith.constant 0 : i32
    %30 = tpu.memref_slice %arg5[%0, %c5_i32_25, %c0_i32_26] : memref<2x8x256xf32, #tpu.memory_space<vmem>> -> memref<1x1x256xf32, #tpu.memory_space<vmem>>
    %31 = tpu.memref_squeeze %30 : memref<1x1x256xf32, #tpu.memory_space<vmem>> -> memref<1x256xf32, #tpu.memory_space<vmem>>
    %32 = tpu.memref_slice %arg6[%0, %c5_i32] : memref<2x8x!tpu.dma_semaphore, #tpu.memory_space<semaphore_mem>> -> memref<1x1x!tpu.dma_semaphore, #tpu.memory_space<semaphore_mem>>
    %33 = tpu.memref_squeeze %32 : memref<1x1x!tpu.dma_semaphore, #tpu.memory_space<semaphore_mem>> -> memref<!tpu.dma_semaphore, #tpu.memory_space<semaphore_mem>>
    tpu.wait_dma2 semaphore(%33 : memref<!tpu.dma_semaphore, #tpu.memory_space<semaphore_mem>>) src(%29 : memref<1x256xf32, #tpu.memory_space<any>>) dst(%31 : memref<1x256xf32, #tpu.memory_space<vmem>>)
    %c6_i32 = arith.constant 6 : i32
    %c0_i32_27 = arith.constant 0 : i32
    %c0_i32_28 = arith.constant 0 : i32
    %34 = tpu.memref_slice %arg3[%c0_i32_27, %c0_i32_28] : memref<256x256xf32, #tpu.memory_space<any>> -> memref<1x256xf32, #tpu.memory_space<any>>
    %c6_i32_29 = arith.constant 6 : i32
    %c0_i32_30 = arith.constant 0 : i32
    %35 = tpu.memref_slice %arg5[%0, %c6_i32_29, %c0_i32_30] : memref<2x8x256xf32, #tpu.memory_space<vmem>> -> memref<1x1x256xf32, #tpu.memory_space<vmem>>
    %36 = tpu.memref_squeeze %35 : memref<1x1x256xf32, #tpu.memory_space<vmem>> -> memref<1x256xf32, #tpu.memory_space<vmem>>
    %37 = tpu.memref_slice %arg6[%0, %c6_i32] : memref<2x8x!tpu.dma_semaphore, #tpu.memory_space<semaphore_mem>> -> memref<1x1x!tpu.dma_semaphore, #tpu.memory_space<semaphore_mem>>
    %38 = tpu.memref_squeeze %37 : memref<1x1x!tpu.dma_semaphore, #tpu.memory_space<semaphore_mem>> -> memref<!tpu.dma_semaphore, #tpu.memory_space<semaphore_mem>>
    tpu.wait_dma2 semaphore(%38 : memref<!tpu.dma_semaphore, #tpu.memory_space<semaphore_mem>>) src(%34 : memref<1x256xf32, #tpu.memory_space<any>>) dst(%36 : memref<1x256xf32, #tpu.memory_space<vmem>>)
    %c7_i32 = arith.constant 7 : i32
    %c0_i32_31 = arith.constant 0 : i32
    %c0_i32_32 = arith.constant 0 : i32
    %39 = tpu.memref_slice %arg3[%c0_i32_31, %c0_i32_32] : memref<256x256xf32, #tpu.memory_space<any>> -> memref<1x256xf32, #tpu.memory_space<any>>
    %c7_i32_33 = arith.constant 7 : i32
    %c0_i32_34 = arith.constant 0 : i32
    %40 = tpu.memref_slice %arg5[%0, %c7_i32_33, %c0_i32_34] : memref<2x8x256xf32, #tpu.memory_space<vmem>> -> memref<1x1x256xf32, #tpu.memory_space<vmem>>
    %41 = tpu.memref_squeeze %40 : memref<1x1x256xf32, #tpu.memory_space<vmem>> -> memref<1x256xf32, #tpu.memory_space<vmem>>
    %42 = tpu.memref_slice %arg6[%0, %c7_i32] : memref<2x8x!tpu.dma_semaphore, #tpu.memory_space<semaphore_mem>> -> memref<1x1x!tpu.dma_semaphore, #tpu.memory_space<semaphore_mem>>
    %43 = tpu.memref_squeeze %42 : memref<1x1x!tpu.dma_semaphore, #tpu.memory_space<semaphore_mem>> -> memref<!tpu.dma_semaphore, #tpu.memory_space<semaphore_mem>>
    tpu.wait_dma2 semaphore(%43 : memref<!tpu.dma_semaphore, #tpu.memory_space<semaphore_mem>>) src(%39 : memref<1x256xf32, #tpu.memory_space<any>>) dst(%41 : memref<1x256xf32, #tpu.memory_space<vmem>>)
    %c1_i32_35 = arith.constant 1 : i32
    %44 = arith.addi %arg0, %c1_i32_35 : i32
    %c1_i32_36 = arith.constant 1 : i32
    %45 = arith.cmpi slt, %44, %c1_i32_36 : i32
    %46 = arith.extui %45 : i1 to i32
    %c0_i32_37 = arith.constant 0 : i32
    %47 = arith.cmpi ne, %46, %c0_i32_37 : i32
    scf.if %47 {
      %c1_i32_47 = arith.constant 1 : i32
      %59 = arith.addi %arg0, %c1_i32_47 : i32
      %c1_i32_48 = arith.constant 1 : i32
      %60 = arith.subi %c1_i32_48, %0 : i32
      %c256_i32 = arith.constant 256 : i32
      %61 = arith.muli %59, %c256_i32 : i32
      %62 = tpu.assume_multiple %61, 256 : i32
      %c0_49 = arith.constant 0 : index
      %63 = memref.load %arg1[%c0_49] : memref<8xi32, #tpu.memory_space<smem>>
      %c0_i32_50 = arith.constant 0 : i32
      %64 = tpu.memref_slice %arg3[%63, %62] : memref<256x256xf32, #tpu.memory_space<any>> -> memref<1x256xf32, #tpu.memory_space<any>>
      %c0_i32_51 = arith.constant 0 : i32
      %c0_i32_52 = arith.constant 0 : i32
      %65 = tpu.memref_slice %arg5[%60, %c0_i32_51, %c0_i32_52] : memref<2x8x256xf32, #tpu.memory_space<vmem>> -> memref<1x1x256xf32, #tpu.memory_space<vmem>>
      %66 = tpu.memref_squeeze %65 : memref<1x1x256xf32, #tpu.memory_space<vmem>> -> memref<1x256xf32, #tpu.memory_space<vmem>>
      %67 = tpu.memref_slice %arg6[%60, %c0_i32_50] : memref<2x8x!tpu.dma_semaphore, #tpu.memory_space<semaphore_mem>> -> memref<1x1x!tpu.dma_semaphore, #tpu.memory_space<semaphore_mem>>
      %68 = tpu.memref_squeeze %67 : memref<1x1x!tpu.dma_semaphore, #tpu.memory_space<semaphore_mem>> -> memref<!tpu.dma_semaphore, #tpu.memory_space<semaphore_mem>>
      tpu.enqueue_dma source(%64 : memref<1x256xf32, #tpu.memory_space<any>>) target(%66 : memref<1x256xf32, #tpu.memory_space<vmem>>) target_semaphore(%68 : memref<!tpu.dma_semaphore, #tpu.memory_space<semaphore_mem>>)
      %c1 = arith.constant 1 : index
      %69 = memref.load %arg1[%c1] : memref<8xi32, #tpu.memory_space<smem>>
      %c1_i32_53 = arith.constant 1 : i32
      %70 = tpu.memref_slice %arg3[%69, %62] : memref<256x256xf32, #tpu.memory_space<any>> -> memref<1x256xf32, #tpu.memory_space<any>>
      %c1_i32_54 = arith.constant 1 : i32
      %c0_i32_55 = arith.constant 0 : i32
      %71 = tpu.memref_slice %arg5[%60, %c1_i32_54, %c0_i32_55] : memref<2x8x256xf32, #tpu.memory_space<vmem>> -> memref<1x1x256xf32, #tpu.memory_space<vmem>>
      %72 = tpu.memref_squeeze %71 : memref<1x1x256xf32, #tpu.memory_space<vmem>> -> memref<1x256xf32, #tpu.memory_space<vmem>>
      %73 = tpu.memref_slice %arg6[%60, %c1_i32_53] : memref<2x8x!tpu.dma_semaphore, #tpu.memory_space<semaphore_mem>> -> memref<1x1x!tpu.dma_semaphore, #tpu.memory_space<semaphore_mem>>
      %74 = tpu.memref_squeeze %73 : memref<1x1x!tpu.dma_semaphore, #tpu.memory_space<semaphore_mem>> -> memref<!tpu.dma_semaphore, #tpu.memory_space<semaphore_mem>>
      tpu.enqueue_dma source(%70 : memref<1x256xf32, #tpu.memory_space<any>>) target(%72 : memref<1x256xf32, #tpu.memory_space<vmem>>) target_semaphore(%74 : memref<!tpu.dma_semaphore, #tpu.memory_space<semaphore_mem>>)
      %c2 = arith.constant 2 : index
      %75 = memref.load %arg1[%c2] : memref<8xi32, #tpu.memory_space<smem>>
      %c2_i32_56 = arith.constant 2 : i32
      %76 = tpu.memref_slice %arg3[%75, %62] : memref<256x256xf32, #tpu.memory_space<any>> -> memref<1x256xf32, #tpu.memory_space<any>>
      %c2_i32_57 = arith.constant 2 : i32
      %c0_i32_58 = arith.constant 0 : i32
      %77 = tpu.memref_slice %arg5[%60, %c2_i32_57, %c0_i32_58] : memref<2x8x256xf32, #tpu.memory_space<vmem>> -> memref<1x1x256xf32, #tpu.memory_space<vmem>>
      %78 = tpu.memref_squeeze %77 : memref<1x1x256xf32, #tpu.memory_space<vmem>> -> memref<1x256xf32, #tpu.memory_space<vmem>>
      %79 = tpu.memref_slice %arg6[%60, %c2_i32_56] : memref<2x8x!tpu.dma_semaphore, #tpu.memory_space<semaphore_mem>> -> memref<1x1x!tpu.dma_semaphore, #tpu.memory_space<semaphore_mem>>
      %80 = tpu.memref_squeeze %79 : memref<1x1x!tpu.dma_semaphore, #tpu.memory_space<semaphore_mem>> -> memref<!tpu.dma_semaphore, #tpu.memory_space<semaphore_mem>>
      tpu.enqueue_dma source(%76 : memref<1x256xf32, #tpu.memory_space<any>>) target(%78 : memref<1x256xf32, #tpu.memory_space<vmem>>) target_semaphore(%80 : memref<!tpu.dma_semaphore, #tpu.memory_space<semaphore_mem>>)
      %c3 = arith.constant 3 : index
      %81 = memref.load %arg1[%c3] : memref<8xi32, #tpu.memory_space<smem>>
      %c3_i32_59 = arith.constant 3 : i32
      %82 = tpu.memref_slice %arg3[%81, %62] : memref<256x256xf32, #tpu.memory_space<any>> -> memref<1x256xf32, #tpu.memory_space<any>>
      %c3_i32_60 = arith.constant 3 : i32
      %c0_i32_61 = arith.constant 0 : i32
      %83 = tpu.memref_slice %arg5[%60, %c3_i32_60, %c0_i32_61] : memref<2x8x256xf32, #tpu.memory_space<vmem>> -> memref<1x1x256xf32, #tpu.memory_space<vmem>>
      %84 = tpu.memref_squeeze %83 : memref<1x1x256xf32, #tpu.memory_space<vmem>> -> memref<1x256xf32, #tpu.memory_space<vmem>>
      %85 = tpu.memref_slice %arg6[%60, %c3_i32_59] : memref<2x8x!tpu.dma_semaphore, #tpu.memory_space<semaphore_mem>> -> memref<1x1x!tpu.dma_semaphore, #tpu.memory_space<semaphore_mem>>
      %86 = tpu.memref_squeeze %85 : memref<1x1x!tpu.dma_semaphore, #tpu.memory_space<semaphore_mem>> -> memref<!tpu.dma_semaphore, #tpu.memory_space<semaphore_mem>>
      tpu.enqueue_dma source(%82 : memref<1x256xf32, #tpu.memory_space<any>>) target(%84 : memref<1x256xf32, #tpu.memory_space<vmem>>) target_semaphore(%86 : memref<!tpu.dma_semaphore, #tpu.memory_space<semaphore_mem>>)
      %c4 = arith.constant 4 : index
      %87 = memref.load %arg1[%c4] : memref<8xi32, #tpu.memory_space<smem>>
      %c4_i32_62 = arith.constant 4 : i32
      %88 = tpu.memref_slice %arg3[%87, %62] : memref<256x256xf32, #tpu.memory_space<any>> -> memref<1x256xf32, #tpu.memory_space<any>>
      %c4_i32_63 = arith.constant 4 : i32
      %c0_i32_64 = arith.constant 0 : i32
      %89 = tpu.memref_slice %arg5[%60, %c4_i32_63, %c0_i32_64] : memref<2x8x256xf32, #tpu.memory_space<vmem>> -> memref<1x1x256xf32, #tpu.memory_space<vmem>>
      %90 = tpu.memref_squeeze %89 : memref<1x1x256xf32, #tpu.memory_space<vmem>> -> memref<1x256xf32, #tpu.memory_space<vmem>>
      %91 = tpu.memref_slice %arg6[%60, %c4_i32_62] : memref<2x8x!tpu.dma_semaphore, #tpu.memory_space<semaphore_mem>> -> memref<1x1x!tpu.dma_semaphore, #tpu.memory_space<semaphore_mem>>
      %92 = tpu.memref_squeeze %91 : memref<1x1x!tpu.dma_semaphore, #tpu.memory_space<semaphore_mem>> -> memref<!tpu.dma_semaphore, #tpu.memory_space<semaphore_mem>>
      tpu.enqueue_dma source(%88 : memref<1x256xf32, #tpu.memory_space<any>>) target(%90 : memref<1x256xf32, #tpu.memory_space<vmem>>) target_semaphore(%92 : memref<!tpu.dma_semaphore, #tpu.memory_space<semaphore_mem>>)
      %c5 = arith.constant 5 : index
      %93 = memref.load %arg1[%c5] : memref<8xi32, #tpu.memory_space<smem>>
      %c5_i32_65 = arith.constant 5 : i32
      %94 = tpu.memref_slice %arg3[%93, %62] : memref<256x256xf32, #tpu.memory_space<any>> -> memref<1x256xf32, #tpu.memory_space<any>>
      %c5_i32_66 = arith.constant 5 : i32
      %c0_i32_67 = arith.constant 0 : i32
      %95 = tpu.memref_slice %arg5[%60, %c5_i32_66, %c0_i32_67] : memref<2x8x256xf32, #tpu.memory_space<vmem>> -> memref<1x1x256xf32, #tpu.memory_space<vmem>>
      %96 = tpu.memref_squeeze %95 : memref<1x1x256xf32, #tpu.memory_space<vmem>> -> memref<1x256xf32, #tpu.memory_space<vmem>>
      %97 = tpu.memref_slice %arg6[%60, %c5_i32_65] : memref<2x8x!tpu.dma_semaphore, #tpu.memory_space<semaphore_mem>> -> memref<1x1x!tpu.dma_semaphore, #tpu.memory_space<semaphore_mem>>
      %98 = tpu.memref_squeeze %97 : memref<1x1x!tpu.dma_semaphore, #tpu.memory_space<semaphore_mem>> -> memref<!tpu.dma_semaphore, #tpu.memory_space<semaphore_mem>>
      tpu.enqueue_dma source(%94 : memref<1x256xf32, #tpu.memory_space<any>>) target(%96 : memref<1x256xf32, #tpu.memory_space<vmem>>) target_semaphore(%98 : memref<!tpu.dma_semaphore, #tpu.memory_space<semaphore_mem>>)
      %c6 = arith.constant 6 : index
      %99 = memref.load %arg1[%c6] : memref<8xi32, #tpu.memory_space<smem>>
      %c6_i32_68 = arith.constant 6 : i32
      %100 = tpu.memref_slice %arg3[%99, %62] : memref<256x256xf32, #tpu.memory_space<any>> -> memref<1x256xf32, #tpu.memory_space<any>>
      %c6_i32_69 = arith.constant 6 : i32
      %c0_i32_70 = arith.constant 0 : i32
      %101 = tpu.memref_slice %arg5[%60, %c6_i32_69, %c0_i32_70] : memref<2x8x256xf32, #tpu.memory_space<vmem>> -> memref<1x1x256xf32, #tpu.memory_space<vmem>>
      %102 = tpu.memref_squeeze %101 : memref<1x1x256xf32, #tpu.memory_space<vmem>> -> memref<1x256xf32, #tpu.memory_space<vmem>>
      %103 = tpu.memref_slice %arg6[%60, %c6_i32_68] : memref<2x8x!tpu.dma_semaphore, #tpu.memory_space<semaphore_mem>> -> memref<1x1x!tpu.dma_semaphore, #tpu.memory_space<semaphore_mem>>
      %104 = tpu.memref_squeeze %103 : memref<1x1x!tpu.dma_semaphore, #tpu.memory_space<semaphore_mem>> -> memref<!tpu.dma_semaphore, #tpu.memory_space<semaphore_mem>>
      tpu.enqueue_dma source(%100 : memref<1x256xf32, #tpu.memory_space<any>>) target(%102 : memref<1x256xf32, #tpu.memory_space<vmem>>) target_semaphore(%104 : memref<!tpu.dma_semaphore, #tpu.memory_space<semaphore_mem>>)
      %c7 = arith.constant 7 : index
      %105 = memref.load %arg1[%c7] : memref<8xi32, #tpu.memory_space<smem>>
      %c7_i32_71 = arith.constant 7 : i32
      %106 = tpu.memref_slice %arg3[%105, %62] : memref<256x256xf32, #tpu.memory_space<any>> -> memref<1x256xf32, #tpu.memory_space<any>>
      %c7_i32_72 = arith.constant 7 : i32
      %c0_i32_73 = arith.constant 0 : i32
      %107 = tpu.memref_slice %arg5[%60, %c7_i32_72, %c0_i32_73] : memref<2x8x256xf32, #tpu.memory_space<vmem>> -> memref<1x1x256xf32, #tpu.memory_space<vmem>>
      %108 = tpu.memref_squeeze %107 : memref<1x1x256xf32, #tpu.memory_space<vmem>> -> memref<1x256xf32, #tpu.memory_space<vmem>>
      %109 = tpu.memref_slice %arg6[%60, %c7_i32_71] : memref<2x8x!tpu.dma_semaphore, #tpu.memory_space<semaphore_mem>> -> memref<1x1x!tpu.dma_semaphore, #tpu.memory_space<semaphore_mem>>
      %110 = tpu.memref_squeeze %109 : memref<1x1x!tpu.dma_semaphore, #tpu.memory_space<semaphore_mem>> -> memref<!tpu.dma_semaphore, #tpu.memory_space<semaphore_mem>>
      tpu.enqueue_dma source(%106 : memref<1x256xf32, #tpu.memory_space<any>>) target(%108 : memref<1x256xf32, #tpu.memory_space<vmem>>) target_semaphore(%110 : memref<!tpu.dma_semaphore, #tpu.memory_space<semaphore_mem>>)
    } else {
    }
    %c0 = arith.constant 0 : index
    %c0_38 = arith.constant 0 : index
    %48 = vector.load %arg7[%c0, %c0_38] : memref<8x128xf32, #tpu.memory_space<vmem>>, vector<8x128xf32>
    %49 = arith.index_cast %0 : i32 to index
    %c0_39 = arith.constant 0 : index
    %c0_40 = arith.constant 0 : index
    %50 = vector.load %arg5[%49, %c0_39, %c0_40] : memref<2x8x256xf32, #tpu.memory_space<vmem>>, vector<1x8x256xf32>
    %51 = vector.shape_cast %50 : vector<1x8x256xf32> to vector<8x256xf32>
    %c0_41 = arith.constant 0 : index
    %c0_42 = arith.constant 0 : index
    %52 = vector.load %arg2[%c0_41, %c0_42] : memref<256x128xf32, #tpu.memory_space<vmem>>, vector<256x128xf32>
    %cst = arith.constant dense<0.000000e+00> : vector<8x128xf32>
    %53 = tpu.matmul %51, %52, %cst {dimension_numbers = #tpu.dot_dimension_numbers<[1], [0], [0], [1], [0, 0, 1, 1], [], []>} : vector<8x256xf32>, vector<256x128xf32>, vector<8x128xf32> -> vector<8x128xf32>
    %54 = arith.addf %48, %53 : vector<8x128xf32>
    %c0_43 = arith.constant 0 : index
    %c0_44 = arith.constant 0 : index
    %55 = vector.load %arg7[%c0_43, %c0_44] : memref<8x128xf32, #tpu.memory_space<vmem>>, vector<8x128xf32>
    tpu.vector_store %arg7[%c0_43, %c0_44], %54 {strides = array<i32>} : memref<8x128xf32, #tpu.memory_space<vmem>>, vector<8x128xf32>,
    %c0_i32_45 = arith.constant 0 : i32
    %56 = arith.cmpi eq, %arg0, %c0_i32_45 : i32
    %57 = arith.extui %56 : i1 to i32
    %c0_i32_46 = arith.constant 0 : i32
    %58 = arith.cmpi ne, %57, %c0_i32_46 : i32
    scf.if %58 {
      %c0_47 = arith.constant 0 : index
      %c0_48 = arith.constant 0 : index
      %59 = vector.load %arg7[%c0_47, %c0_48] : memref<8x128xf32, #tpu.memory_space<vmem>>, vector<8x128xf32>
      %c0_49 = arith.constant 0 : index
      %c0_50 = arith.constant 0 : index
      %60 = vector.load %arg4[%c0_49, %c0_50] : memref<8x128xf32, #tpu.memory_space<vmem>>, vector<8x128xf32>
      tpu.vector_store %arg4[%c0_49, %c0_50], %59 {strides = array<i32>} : memref<8x128xf32, #tpu.memory_space<vmem>>, vector<8x128xf32>,
    } else {
    }
    return
  }
  func.func @transform_0(%arg0: i32, %arg1: memref<8xi32, #tpu.memory_space<smem>>) -> (i32, i32) {
    %c0_i32 = arith.constant 0 : i32
    %c0_i32_0 = arith.constant 0 : i32
    return %arg0, %c0_i32 : i32, i32
  }
  func.func @transform_2(%arg0: i32, %arg1: memref<8xi32, #tpu.memory_space<smem>>) -> (i32, i32) {
    %c0_i32 = arith.constant 0 : i32
    %c0_i32_0 = arith.constant 0 : i32
    %c0_i32_1 = arith.constant 0 : i32
    return %c0_i32, %c0_i32_0 : i32, i32
  }
}

</mosaic_0001>

<llo_original>
// kernel: tpu_custom_call.1
$region0: #{tpu_custom_call.1}
  #allocation0 [shape = 'u32[]', space=smem, size = 0x4, offset = 0x4, fixed_abs, tag = 'smem constant byte address 0x4 - core index']
  #allocation1 [shape = 'u32[144,128]{1,0:T(1,128)}', space=vmem, size = 0x12000, scoped, tag = 'internal scratch']
  #allocation2 [shape = 'f32[2,8,256]{2,1,0:T(8,128)}', space=vmem, size = 0x4000, scoped, tag = 'scratch operand']
  #allocation3 [shape = 's32[16]{0}', space=sflag, size = 0x40, scoped, tag = 'scratch operand']
  #allocation4 [shape = 'f32[8,128]{1,0:T(8,128)}', space=vmem, size = 0x1000, scoped, tag = 'scratch operand']
  #allocation5 [shape = 's32[1]{0}', space=sflag, size = 0x4, scoped, tag = 'scoped memory for tpu_custom_call.1']
  #allocation6 [shape = 'u8[512]{0}', space=smem, size = 0x200, scoped, tag = 'prefetched SMEM operand 0']
  #allocation11 [shape = 's32[]', space=sflag, size = 0x4, offset = 0, fixed_abs, tag = 'sflag constant byte address 0x0 - dummy sync flag']
  #allocation12 [shape = 's32[]', space=sflag, size = 0x4, offset = 0, fixed_abs, tag = 'sflag constant byte address 0x0 - dummy sync flag']
  #allocation13 [shape = 's32[]', space=sflag, size = 0x4, offset = 0, fixed_abs, tag = 'sflag constant byte address 0x0 - dummy sync flag']
  #allocation14 [shape = 's32[]', space=sflag, size = 0x4, offset = 0, fixed_abs, tag = 'sflag constant byte address 0x0 - dummy sync flag']
  #allocation15 [shape = 's32[]', space=sflag, size = 0x4, offset = 0, fixed_abs, tag = 'sflag constant byte address 0x0 - dummy sync flag']
  #allocation16 [shape = 's32[]', space=sflag, size = 0x4, offset = 0, fixed_abs, tag = 'sflag constant byte address 0x0 - dummy sync flag']
  #allocation17 [shape = 's32[]', space=sflag, size = 0x4, offset = 0, fixed_abs, tag = 'sflag constant byte address 0x0 - dummy sync flag']
  #allocation18 [shape = 's32[]', space=sflag, size = 0x4, offset = 0, fixed_abs, tag = 'sflag constant byte address 0x0 - dummy sync flag']
  #allocation19 [shape = 's32[]', space=sflag, size = 0x4, offset = 0, fixed_abs, tag = 'sflag constant byte address 0x0 - dummy sync flag']
  #allocation20 [shape = 's32[]', space=sflag, size = 0x4, offset = 0, fixed_abs, tag = 'sflag constant byte address 0x0 - dummy sync flag']
  #allocation21 [shape = 's32[]', space=sflag, size = 0x4, offset = 0, fixed_abs, tag = 'sflag constant byte address 0x0 - dummy sync flag']
  #allocation22 [shape = 's32[]', space=sflag, size = 0x4, offset = 0, fixed_abs, tag = 'sflag constant byte address 0x0 - dummy sync flag']
  #allocation23 [shape = 's32[]', space=sflag, size = 0x4, offset = 0, fixed_abs, tag = 'sflag constant byte address 0x0 - dummy sync flag']
  #allocation24 [shape = 's32[]', space=sflag, size = 0x4, offset = 0, fixed_abs, tag = 'sflag constant byte address 0x0 - dummy sync flag']
  #allocation25 [shape = 's32[]', space=sflag, size = 0x4, offset = 0, fixed_abs, tag = 'sflag constant byte address 0x0 - dummy sync flag']
  #allocation26 [shape = 's32[]', space=sflag, size = 0x4, offset = 0, fixed_abs, tag = 'sflag constant byte address 0x0 - dummy sync flag']
  %s0 = inlined_call_operand.hbm [shape: s32[8], index: 0, kind: input, shape index: {}]
  %s1 = inlined_call_operand.hbm [shape: f32[256,128], index: 1, kind: input, shape index: {}]
  %s2 = inlined_call_operand.hbm [shape: f32[256,256], index: 2, kind: input, shape index: {}]
  %s3 = inlined_call_operand.hbm [shape: f32[8,128], index: 3, kind: output, shape index: {}]
  %s4 = sld [smem:[#allocation0]]
  $region30: #{tpu_custom_call.1} parent=0
    _
  %s6 = ssub.s32 1, %s4
  %s7 = scalar_select 0, %s6, %s4
  %9 = dma.hbm_to_smem %s0, 16, [#allocation6], [#allocation5]
  %10 = dma.done [#allocation5], 16
  %11 = sfence
  $region1: #{tpu_custom_call.1} parent=0
    #allocation7 [shape = 'u8[131072]{0}', space=vmem, size = 0x20000, scoped, tag = 'input window, operand 1, single buffered']
    #allocation8 [shape = 's32[1]{0}', space=sflag, size = 0x4, scoped, tag = 'scoped memory for tpu_custom_call.1']
    #allocation9 [shape = 's32[1]{0}', space=sflag, size = 0x4, scoped, tag = 'scoped memory for tpu_custom_call.1']
    #allocation10 [shape = 'u8[4096]{0}', space=vmem, size = 0x1000, scoped, tag = 'output window, operand 0, single buffered']
    %12 = vsyncpa [#allocation8], 0
    %13 = vsyncpa [#allocation9], 0
    // Predicated region
    $region2: #{tpu_custom_call.1} parent=1 // pred_check
      _
    $region3: #{tpu_custom_call.1} parent=1 // pred_check_branch
      %15 = sbr.rel (0) target = $region5
    $region4: #{tpu_custom_call.1} parent=1 // pred_region
      %s17 = ssub.s32 4096, 4096
      %18 = vsyncadd [#allocation8], %s17
      %s19 = sshll.u32 [#allocation7], 4
      %s20 = int_to_ptr.vmem [resolvable:$true] %s19
      %25 = dma.hbm_to_vmem [thread:$0]  %s1, 4096, %s20, [#allocation8], 128, 128, 8
    $region5: #{tpu_custom_call.1} parent=1 // pred_fallthru
      _
    // Predicated region
    $region6: #{tpu_custom_call.1} parent=1 // pred_check
      _
    $region7: #{tpu_custom_call.1} parent=1 // pred_check_branch
      %27 = sbr.rel (0) target = $region9
    $region8: #{tpu_custom_call.1} parent=1 // pred_region
      %28 = dma.done [#allocation8], 4096
    $region9: #{tpu_custom_call.1} parent=1 // pred_fallthru
      _
    %s29 = sand.u32 0, 1
    %p30 = scmp.eq.s32.totalorder 0, 0
    // Predicated region
    $region10: #{tpu_custom_call.1} parent=1 // pred_check
      %p31 = pneg %p30
    $region11: #{tpu_custom_call.1} parent=1 // pred_check_branch
      %33 = sbr.rel (%p31) target = $region13
    $region12: #{tpu_custom_call.1} parent=1 // pred_region
      %34 = vst [vmem:[#allocation4] sm:$0xff] 0.0
      %s35 = sld [smem:[#allocation6]]
      %s36 = sshrl.u32 %s35, 3
      %s37 = sand.u32 %s35, 7
      %s38 = smul.u32 %s36, 16
      %s39 = sadd.s32 %s37, %s38
      %s40 = smul.u32 0, 8
      %s41 = sadd.s32 %s40, %s39
      %s42 = smul.addr %s41, 16
      %s43 = scalar_lea.hbm %s2, %s42
      %s45 = sshll.u32 [#allocation2], 4
      %s46 = int_to_ptr.vmem [resolvable:$true] %s45
      %48 = dma.hbm_to_vmem [thread:$0]  %s43, 32, %s46, [#allocation3], 128, 128, 1
      %s49 = sld [smem:[#allocation6 + $0x1]]
      %s50 = sshrl.u32 %s49, 3
      %s51 = sand.u32 %s49, 7
      %s52 = smul.u32 %s50, 16
      %s53 = sadd.s32 %s51, %s52
      %s54 = sadd.s32 %s40, %s53
      %s55 = smul.addr %s54, 16
      %s56 = scalar_lea.hbm %s2, %s55
      %s57 = scalar_lea.vmem [#allocation2], 1
      %s58 = scalar_lea.sflag [#allocation3], 1
      %s60 = sshll.u32 %s57, 4
      %s61 = int_to_ptr.vmem [resolvable:$true] %s60
      %63 = dma.hbm_to_vmem [thread:$0]  %s56, 32, %s61, %s58, 128, 128, 1
      %s64 = sld [smem:[#allocation6 + $0x2]]
      %s65 = sshrl.u32 %s64, 3
      %s66 = sand.u32 %s64, 7
      %s67 = smul.u32 %s65, 16
      %s68 = sadd.s32 %s66, %s67
      %s69 = sadd.s32 %s40, %s68
      %s70 = smul.addr %s69, 16
      %s71 = scalar_lea.hbm %s2, %s70
      %s72 = scalar_lea.vmem [#allocation2], 2
      %s73 = scalar_lea.sflag [#allocation3], 2
      %s75 = sshll.u32 %s72, 4
      %s76 = int_to_ptr.vmem [resolvable:$true] %s75
      %78 = dma.hbm_to_vmem [thread:$0]  %s71, 32, %s76, %s73, 128, 128, 1
      %s79 = sld [smem:[#allocation6 + $0x3]]
      %s80 = sshrl.u32 %s79, 3
      %s81 = sand.u32 %s79, 7
      %s82 = smul.u32 %s80, 16
      %s83 = sadd.s32 %s81, %s82
      %s84 = sadd.s32 %s40, %s83
      %s85 = smul.addr %s84, 16
      %s86 = scalar_lea.hbm %s2, %s85
      %s87 = scalar_lea.vmem [#allocation2], 3
      %s88 = scalar_lea.sflag [#allocation3], 3
      %s90 = sshll.u32 %s87, 4
      %s91 = int_to_ptr.vmem [resolvable:$true] %s90
      %93 = dma.hbm_to_vmem [thread:$0]  %s86, 32, %s91, %s88, 128, 128, 1
      %s94 = sld [smem:[#allocation6 + $0x4]]
      %s95 = sshrl.u32 %s94, 3
      %s96 = sand.u32 %s94, 7
      %s97 = smul.u32 %s95, 16
      %s98 = sadd.s32 %s96, %s97
      %s99 = sadd.s32 %s40, %s98
      %s100 = smul.addr %s99, 16
      %s101 = scalar_lea.hbm %s2, %s100
      %s102 = scalar_lea.vmem [#allocation2], 4
      %s103 = scalar_lea.sflag [#allocation3], 4
      %s105 = sshll.u32 %s102, 4
      %s106 = int_to_ptr.vmem [resolvable:$true] %s105
      %108 = dma.hbm_to_vmem [thread:$0]  %s101, 32, %s106, %s103, 128, 128, 1
      %s109 = sld [smem:[#allocation6 + $0x5]]
      %s110 = sshrl.u32 %s109, 3
      %s111 = sand.u32 %s109, 7
      %s112 = smul.u32 %s110, 16
      %s113 = sadd.s32 %s111, %s112
      %s114 = sadd.s32 %s40, %s113
      %s115 = smul.addr %s114, 16
      %s116 = scalar_lea.hbm %s2, %s115
      %s117 = scalar_lea.vmem [#allocation2], 5
      %s118 = scalar_lea.sflag [#allocation3], 5
      %s120 = sshll.u32 %s117, 4
      %s121 = int_to_ptr.vmem [resolvable:$true] %s120
      %123 = dma.hbm_to_vmem [thread:$0]  %s116, 32, %s121, %s118, 128, 128, 1
      %s124 = sld [smem:[#allocation6 + $0x6]]
      %s125 = sshrl.u32 %s124, 3
      %s126 = sand.u32 %s124, 7
      %s127 = smul.u32 %s125, 16
      %s128 = sadd.s32 %s126, %s127
      %s129 = sadd.s32 %s40, %s128
      %s130 = smul.addr %s129, 16
      %s131 = scalar_lea.hbm %s2, %s130
      %s132 = scalar_lea.vmem [#allocation2], 6
      %s133 = scalar_lea.sflag [#allocation3], 6
      %s135 = sshll.u32 %s132, 4
      %s136 = int_to_ptr.vmem [resolvable:$true] %s135
      %138 = dma.hbm_to_vmem [thread:$0]  %s131, 32, %s136, %s133, 128, 128, 1
      %s139 = sld [smem:[#allocation6 + $0x7]]
      %s140 = sshrl.u32 %s139, 3
      %s141 = sand.u32 %s139, 7
      %s142 = smul.u32 %s140, 16
      %s143 = sadd.s32 %s141, %s142
      %s144 = sadd.s32 %s40, %s143
      %s145 = smul.addr %s144, 16
      %s146 = scalar_lea.hbm %s2, %s145
      %s147 = scalar_lea.vmem [#allocation2], 7
      %s148 = scalar_lea.sflag [#allocation3], 7
      %s150 = sshll.u32 %s147, 4
      %s151 = int_to_ptr.vmem [resolvable:$true] %s150
      %153 = dma.hbm_to_vmem [thread:$0]  %s146, 32, %s151, %s148, 128, 128, 1
    $region13: #{tpu_custom_call.1} parent=1 // pred_fallthru
      _
    %s154 = smul.u32 %s29, 8
    %s155 = scalar_lea.sflag [#allocation3], %s154
    %s156 = smul.u32 1, 2
    %s157 = sshll.u32 %s156, 4
    %158 = dma.done %s155, %s157
    %s159 = sadd.s32 1, %s154
    %s160 = scalar_lea.sflag [#allocation3], %s159
    %s161 = sshll.u32 %s156, 4
    %162 = dma.done %s160, %s161
    %s163 = sadd.s32 2, %s154
    %s164 = scalar_lea.sflag [#allocation3], %s163
    %s165 = sshll.u32 %s156, 4
    %166 = dma.done %s164, %s165
    %s167 = sadd.s32 3, %s154
    %s168 = scalar_lea.sflag [#allocation3], %s167
    %s169 = sshll.u32 %s156, 4
    %170 = dma.done %s168, %s169
    %s171 = sadd.s32 4, %s154
    %s172 = scalar_lea.sflag [#allocation3], %s171
    %s173 = sshll.u32 %s156, 4
    %174 = dma.done %s172, %s173
    %s175 = sadd.s32 5, %s154
    %s176 = scalar_lea.sflag [#allocation3], %s175
    %s177 = sshll.u32 %s156, 4
    %178 = dma.done %s176, %s177
    %s179 = sadd.s32 6, %s154
    %s180 = scalar_lea.sflag [#allocation3], %s179
    %s181 = sshll.u32 %s156, 4
    %182 = dma.done %s180, %s181
    %s183 = sadd.s32 7, %s154
    %s184 = scalar_lea.sflag [#allocation3], %s183
    %s185 = sshll.u32 %s156, 4
    %186 = dma.done %s184, %s185
    %s187 = sadd.s32 0, 1
    %p188 = scmp.lt.s32.totalorder %s187, 1
    // Predicated region
    $region14: #{tpu_custom_call.1} parent=1 // pred_check
      %p189 = pneg %p188
    $region15: #{tpu_custom_call.1} parent=1 // pred_check_branch
      %191 = sbr.rel (%p189) target = $region17
    $region16: #{tpu_custom_call.1} parent=1 // pred_region
      %s192 = ssub.s32 1, %s29
      %s193 = smul.u32 %s187, 256
      %s194 = sld [smem:[#allocation6]]
      %s195 = sshrl.u32 %s194, 3
      %s196 = sand.u32 %s194, 7
      %s197 = smul.u32 %s195, 16
      %s198 = sadd.s32 %s196, %s197
      %s199 = sshra.s32 %s193, 7
      %s200 = sand.u32 %s193, 127
      %s201 = smul.u32 %s199, 8
      %s202 = sadd.s32 %s201, %s198
      %s203 = smul.addr %s202, 16
      %s204 = scalar_lea.hbm %s2, %s203
      %s205 = smul.u32 %s192, 16
      %s206 = scalar_lea.vmem [#allocation2], %s205
      %s207 = smul.u32 %s192, 8
      %s208 = scalar_lea.sflag [#allocation3], %s207
      %s210 = sshll.u32 %s206, 4
      %s211 = int_to_ptr.vmem [resolvable:$true] %s210
      %213 = dma.hbm_to_vmem [thread:$0]  %s204, 32, %s211, %s208, 128, 128, 1
      %s214 = sld [smem:[#allocation6 + $0x1]]
      %s215 = sshrl.u32 %s214, 3
      %s216 = sand.u32 %s214, 7
      %s217 = smul.u32 %s215, 16
      %s218 = sadd.s32 %s216, %s217
      %s219 = sadd.s32 %s201, %s218
      %s220 = smul.addr %s219, 16
      %s221 = scalar_lea.hbm %s2, %s220
      %s222 = sadd.s32 1, %s205
      %s223 = scalar_lea.vmem [#allocation2], %s222
      %s224 = sadd.s32 1, %s207
      %s225 = scalar_lea.sflag [#allocation3], %s224
      %s227 = sshll.u32 %s223, 4
      %s228 = int_to_ptr.vmem [resolvable:$true] %s227
      %230 = dma.hbm_to_vmem [thread:$0]  %s221, 32, %s228, %s225, 128, 128, 1
      %s231 = sld [smem:[#allocation6 + $0x2]]
      %s232 = sshrl.u32 %s231, 3
      %s233 = sand.u32 %s231, 7
      %s234 = smul.u32 %s232, 16
      %s235 = sadd.s32 %s233, %s234
      %s236 = sadd.s32 %s201, %s235
      %s237 = smul.addr %s236, 16
      %s238 = scalar_lea.hbm %s2, %s237
      %s239 = sadd.s32 2, %s205
      %s240 = scalar_lea.vmem [#allocation2], %s239
      %s241 = sadd.s32 2, %s207
      %s242 = scalar_lea.sflag [#allocation3], %s241
      %s244 = sshll.u32 %s240, 4
      %s245 = int_to_ptr.vmem [resolvable:$true] %s244
      %247 = dma.hbm_to_vmem [thread:$0]  %s238, 32, %s245, %s242, 128, 128, 1
      %s248 = sld [smem:[#allocation6 + $0x3]]
      %s249 = sshrl.u32 %s248, 3
      %s250 = sand.u32 %s248, 7
      %s251 = smul.u32 %s249, 16
      %s252 = sadd.s32 %s250, %s251
      %s253 = sadd.s32 %s201, %s252
      %s254 = smul.addr %s253, 16
      %s255 = scalar_lea.hbm %s2, %s254
      %s256 = sadd.s32 3, %s205
      %s257 = scalar_lea.vmem [#allocation2], %s256
      %s258 = sadd.s32 3, %s207
      %s259 = scalar_lea.sflag [#allocation3], %s258
      %s261 = sshll.u32 %s257, 4
      %s262 = int_to_ptr.vmem [resolvable:$true] %s261
      %264 = dma.hbm_to_vmem [thread:$0]  %s255, 32, %s262, %s259, 128, 128, 1
      %s265 = sld [smem:[#allocation6 + $0x4]]
      %s266 = sshrl.u32 %s265, 3
      %s267 = sand.u32 %s265, 7
      %s268 = smul.u32 %s266, 16
      %s269 = sadd.s32 %s267, %s268
      %s270 = sadd.s32 %s201, %s269
      %s271 = smul.addr %s270, 16
      %s272 = scalar_lea.hbm %s2, %s271
      %s273 = sadd.s32 4, %s205
      %s274 = scalar_lea.vmem [#allocation2], %s273
      %s275 = sadd.s32 4, %s207
      %s276 = scalar_lea.sflag [#allocation3], %s275
      %s278 = sshll.u32 %s274, 4
      %s279 = int_to_ptr.vmem [resolvable:$true] %s278
      %281 = dma.hbm_to_vmem [thread:$0]  %s272, 32, %s279, %s276, 128, 128, 1
      %s282 = sld [smem:[#allocation6 + $0x5]]
      %s283 = sshrl.u32 %s282, 3
      %s284 = sand.u32 %s282, 7
      %s285 = smul.u32 %s283, 16
      %s286 = sadd.s32 %s284, %s285
      %s287 = sadd.s32 %s201, %s286
      %s288 = smul.addr %s287, 16
      %s289 = scalar_lea.hbm %s2, %s288
      %s290 = sadd.s32 5, %s205
      %s291 = scalar_lea.vmem [#allocation2], %s290
      %s292 = sadd.s32 5, %s207
      %s293 = scalar_lea.sflag [#allocation3], %s292
      %s295 = sshll.u32 %s291, 4
      %s296 = int_to_ptr.vmem [resolvable:$true] %s295
      %298 = dma.hbm_to_vmem [thread:$0]  %s289, 32, %s296, %s293, 128, 128, 1
      %s299 = sld [smem:[#allocation6 + $0x6]]
      %s300 = sshrl.u32 %s299, 3
      %s301 = sand.u32 %s299, 7
      %s302 = smul.u32 %s300, 16
      %s303 = sadd.s32 %s301, %s302
      %s304 = sadd.s32 %s201, %s303
      %s305 = smul.addr %s304, 16
      %s306 = scalar_lea.hbm %s2, %s305
      %s307 = sadd.s32 6, %s205
      %s308 = scalar_lea.vmem [#allocation2], %s307
      %s309 = sadd.s32 6, %s207
      %s310 = scalar_lea.sflag [#allocation3], %s309
      %s312 = sshll.u32 %s308, 4
      %s313 = int_to_ptr.vmem [resolvable:$true] %s312
      %315 = dma.hbm_to_vmem [thread:$0]  %s306, 32, %s313, %s310, 128, 128, 1
      %s316 = sld [smem:[#allocation6 + $0x7]]
      %s317 = sshrl.u32 %s316, 3
      %s318 = sand.u32 %s316, 7
      %s319 = smul.u32 %s317, 16
      %s320 = sadd.s32 %s318, %s319
      %s321 = sadd.s32 %s201, %s320
      %s322 = smul.addr %s321, 16
      %s323 = scalar_lea.hbm %s2, %s322
      %s324 = sadd.s32 7, %s205
      %s325 = scalar_lea.vmem [#allocation2], %s324
      %s326 = sadd.s32 7, %s207
      %s327 = scalar_lea.sflag [#allocation3], %s326
      %s329 = sshll.u32 %s325, 4
      %s330 = int_to_ptr.vmem [resolvable:$true] %s329
      %332 = dma.hbm_to_vmem [thread:$0]  %s323, 32, %s330, %s327, 128, 128, 1
    $region17: #{tpu_custom_call.1} parent=1 // pred_fallthru
      _
    %v333 = vld [vmem:[#allocation4] sm:$0xff]
    %s334 = smul.u32 %s29, 2
    %s335 = smul.addr %s334, 8
    %s336 = scalar_lea.vmem [#allocation2], %s335
    %v337 = vld [vmem:[%s336] sm:$0xff]
    %v338 = vld [vmem:[%s336 + $0x8] sm:$0xff]
    %v339 = vld [vmem:[#allocation7] sm:$0xff]
    %v340 = vld [vmem:[#allocation7 + $0x8] sm:$0xff]
    %v341 = vld [vmem:[#allocation7 + $0x10] sm:$0xff]
    %v342 = vld [vmem:[#allocation7 + $0x18] sm:$0xff]
    %v343 = vld [vmem:[#allocation7 + $0x20] sm:$0xff]
    %v344 = vld [vmem:[#allocation7 + $0x28] sm:$0xff]
    %v345 = vld [vmem:[#allocation7 + $0x30] sm:$0xff]
    %v346 = vld [vmem:[#allocation7 + $0x38] sm:$0xff]
    %v347 = vld [vmem:[#allocation7 + $0x40] sm:$0xff]
    %v348 = vld [vmem:[#allocation7 + $0x48] sm:$0xff]
    %v349 = vld [vmem:[#allocation7 + $0x50] sm:$0xff]
    %v350 = vld [vmem:[#allocation7 + $0x58] sm:$0xff]
    %v351 = vld [vmem:[#allocation7 + $0x60] sm:$0xff]
    %v352 = vld [vmem:[#allocation7 + $0x68] sm:$0xff]
    %v353 = vld [vmem:[#allocation7 + $0x70] sm:$0xff]
    %v354 = vld [vmem:[#allocation7 + $0x78] sm:$0xff]
    %v355 = vld [vmem:[#allocation7 + $0x80] sm:$0xff]
    %v356 = vld [vmem:[#allocation7 + $0x88] sm:$0xff]
    %v357 = vld [vmem:[#allocation7 + $0x90] sm:$0xff]
    %v358 = vld [vmem:[#allocation7 + $0x98] sm:$0xff]
    %v359 = vld [vmem:[#allocation7 + $0xa0] sm:$0xff]
    %v360 = vld [vmem:[#allocation7 + $0xa8] sm:$0xff]
    %v361 = vld [vmem:[#allocation7 + $0xb0] sm:$0xff]
    %v362 = vld [vmem:[#allocation7 + $0xb8] sm:$0xff]
    %v363 = vld [vmem:[#allocation7 + $0xc0] sm:$0xff]
    %v364 = vld [vmem:[#allocation7 + $0xc8] sm:$0xff]
    %v365 = vld [vmem:[#allocation7 + $0xd0] sm:$0xff]
    %v366 = vld [vmem:[#allocation7 + $0xd8] sm:$0xff]
    %v367 = vld [vmem:[#allocation7 + $0xe0] sm:$0xff]
    %v368 = vld [vmem:[#allocation7 + $0xe8] sm:$0xff]
    %v369 = vld [vmem:[#allocation7 + $0xf0] sm:$0xff]
    %v370 = vld [vmem:[#allocation7 + $0xf8] sm:$0xff]
    %371 = vmatprep.subr.mxu0 0.0
    %372 = vmatpush1.msra.mxu0 %v339
    %373 = vmatprep.subr.mxu0 0.0
    %374 = vmatpush1.msra.mxu0 %v340
    %375 = vmatprep.subr.mxu0 0.0
    %376 = vmatpush1.msra.mxu0 %v341
    %377 = vmatprep.subr.mxu0 0.0
    %378 = vmatpush1.msra.mxu0 %v342
    %379 = vmatprep.subr.mxu0 0.0
    %380 = vmatpush1.msra.mxu0 %v343
    %381 = vmatprep.subr.mxu0 0.0
    %382 = vmatpush1.msra.mxu0 %v344
    %383 = vmatprep.subr.mxu0 0.0
    %384 = vmatpush1.msra.mxu0 %v345
    %385 = vmatprep.subr.mxu0 0.0
    %386 = vmatpush1.msra.mxu0 %v346
    %387 = vmatprep.subr.mxu0 0.0
    %388 = vmatpush1.msra.mxu0 %v347
    %389 = vmatprep.subr.mxu0 0.0
    %390 = vmatpush1.msra.mxu0 %v348
    %391 = vmatprep.subr.mxu0 0.0
    %392 = vmatpush1.msra.mxu0 %v349
    %393 = vmatprep.subr.mxu0 0.0
    %394 = vmatpush1.msra.mxu0 %v350
    %395 = vmatprep.subr.mxu0 0.0
    %396 = vmatpush1.msra.mxu0 %v351
    %397 = vmatprep.subr.mxu0 0.0
    %398 = vmatpush1.msra.mxu0 %v352
    %399 = vmatprep.subr.mxu0 0.0
    %400 = vmatpush1.msra.mxu0 %v353
    %401 = vmatprep.subr.mxu0 0.0
    %402 = vmatpush1.msra.mxu0 %v354
    %403 = vmatprep.subr.mxu0 0.0
    %404 = vmatpush1.msra.mxu0 %v355
    %405 = vmatprep.subr.mxu0 0.0
    %406 = vmatpush1.msra.mxu0 %v356
    %407 = vmatprep.subr.mxu0 0.0
    %408 = vmatpush1.msra.mxu0 %v357
    %409 = vmatprep.subr.mxu0 0.0
    %410 = vmatpush1.msra.mxu0 %v358
    %411 = vmatprep.subr.mxu0 0.0
    %412 = vmatpush1.msra.mxu0 %v359
    %413 = vmatprep.subr.mxu0 0.0
    %414 = vmatpush1.msra.mxu0 %v360
    %415 = vmatprep.subr.mxu0 0.0
    %416 = vmatpush1.msra.mxu0 %v361
    %417 = vmatprep.subr.mxu0 0.0
    %418 = vmatpush1.msra.mxu0 %v362
    %419 = vmatprep.subr.mxu0 0.0
    %420 = vmatpush1.msra.mxu0 %v363
    %421 = vmatprep.subr.mxu0 0.0
    %422 = vmatpush1.msra.mxu0 %v364
    %423 = vmatprep.subr.mxu0 0.0
    %424 = vmatpush1.msra.mxu0 %v365
    %425 = vmatprep.subr.mxu0 0.0
    %426 = vmatpush1.msra.mxu0 %v366
    %427 = vmatprep.subr.mxu0 0.0
    %428 = vmatpush1.msra.mxu0 %v367
    %429 = vmatprep.subr.mxu0 0.0
    %430 = vmatpush1.msra.mxu0 %v368
    %431 = vmatprep.subr.mxu0 0.0
    %432 = vmatpush1.msra.mxu0 %v369
    %433 = vmatprep.subr.mxu0 0.0
    %434 = vmatpush1.msra.mxu0 %v370
    %435 = vmatprep.mubr.f32.mxu0 %v338
    %436 = vmatmul.mubr.f32.gmra.mrb[0].mxu0 %v337
    %v437 = vpop.f32.mrb[0].mxu0
    %v438 = vadd.f32 0.0, %v437
    %v439 = vpop.f32.mrb[0].mxu0
    %440 = vdwg.mxu0
    %v441 = vadd.f32 %v333, %v438
    %442 = vst [vmem:[#allocation4] sm:$0xff] %v441
    // Predicated region
    $region18: #{tpu_custom_call.1} parent=1 // pred_check
      %p443 = pneg %p30
    $region19: #{tpu_custom_call.1} parent=1 // pred_check_branch
      %445 = sbr.rel (%p443) target = $region21
    $region20: #{tpu_custom_call.1} parent=1 // pred_region
      %v446 = vld [vmem:[#allocation4] sm:$0xff]
      %447 = vst [vmem:[#allocation10] sm:$0xff] %v446
    $region21: #{tpu_custom_call.1} parent=1 // pred_fallthru
      _
    // Predicated region
    $region22: #{tpu_custom_call.1} parent=1 // pred_check
      _
    $region23: #{tpu_custom_call.1} parent=1 // pred_check_branch
      %449 = sbr.rel (0) target = $region25
    $region24: #{tpu_custom_call.1} parent=1 // pred_region
      %s451 = ssub.s32 128, 128
      %452 = vsyncadd [#allocation9], %s451
      %s454 = sshll.u32 [#allocation10], 4
      %s455 = int_to_ptr.vmem [resolvable:$true] %s454
      %457 = dma.vmem_to_hbm [thread:$0]  %s455, 128, %s3, [#allocation9]
    $region25: #{tpu_custom_call.1} parent=1 // pred_fallthru
      _
    // Predicated region
    $region26: #{tpu_custom_call.1} parent=1 // pred_check
      _
    $region27: #{tpu_custom_call.1} parent=1 // pred_check_branch
      %459 = sbr.rel (0) target = $region29
    $region28: #{tpu_custom_call.1} parent=1 // pred_region
      %460 = dma.done [#allocation9], 128
    $region29: #{tpu_custom_call.1} parent=1 // pred_fallthru
      _
    %461 = vsyncpa [#allocation8], 1
    %462 = vsyncpa [#allocation9], 1
  %463 = vsyncmov [#allocation3]
  %s464 = vpop.sfrf %463
  %p465 = scmp.eq.s32.totalorder %s464, 0
  %p466 = pneg %p465
  %468 = shalt.err (%p466)
  %s469 = scalar_lea.sflag [#allocation3], 1
  %470 = vsyncmov %s469
  %s471 = vpop.sfrf %470
  %p472 = scmp.eq.s32.totalorder %s471, 0
  %p473 = pneg %p472
  %475 = shalt.err (%p473)
  %s476 = scalar_lea.sflag [#allocation3], 2
  %477 = vsyncmov %s476
  %s478 = vpop.sfrf %477
  %p479 = scmp.eq.s32.totalorder %s478, 0
  %p480 = pneg %p479
  %482 = shalt.err (%p480)
  %s483 = scalar_lea.sflag [#allocation3], 3
  %484 = vsyncmov %s483
  %s485 = vpop.sfrf %484
  %p486 = scmp.eq.s32.totalorder %s485, 0
  %p487 = pneg %p486
  %489 = shalt.err (%p487)
  %s490 = scalar_lea.sflag [#allocation3], 4
  %491 = vsyncmov %s490
  %s492 = vpop.sfrf %491
  %p493 = scmp.eq.s32.totalorder %s492, 0
  %p494 = pneg %p493
  %496 = shalt.err (%p494)
  %s497 = scalar_lea.sflag [#allocation3], 5
  %498 = vsyncmov %s497
  %s499 = vpop.sfrf %498
  %p500 = scmp.eq.s32.totalorder %s499, 0
  %p501 = pneg %p500
  %503 = shalt.err (%p501)
  %s504 = scalar_lea.sflag [#allocation3], 6
  %505 = vsyncmov %s504
  %s506 = vpop.sfrf %505
  %p507 = scmp.eq.s32.totalorder %s506, 0
  %p508 = pneg %p507
  %510 = shalt.err (%p508)
  %s511 = scalar_lea.sflag [#allocation3], 7
  %512 = vsyncmov %s511
  %s513 = vpop.sfrf %512
  %p514 = scmp.eq.s32.totalorder %s513, 0
  %p515 = pneg %p514
  %517 = shalt.err (%p515)
  %s518 = scalar_lea.sflag [#allocation3], 8
  %519 = vsyncmov %s518
  %s520 = vpop.sfrf %519
  %p521 = scmp.eq.s32.totalorder %s520, 0
  %p522 = pneg %p521
  %524 = shalt.err (%p522)
  %s525 = scalar_lea.sflag [#allocation3], 9
  %526 = vsyncmov %s525
  %s527 = vpop.sfrf %526
  %p528 = scmp.eq.s32.totalorder %s527, 0
  %p529 = pneg %p528
  %531 = shalt.err (%p529)
  %s532 = scalar_lea.sflag [#allocation3], 10
  %533 = vsyncmov %s532
  %s534 = vpop.sfrf %533
  %p535 = scmp.eq.s32.totalorder %s534, 0
  %p536 = pneg %p535
  %538 = shalt.err (%p536)
  %s539 = scalar_lea.sflag [#allocation3], 11
  %540 = vsyncmov %s539
  %s541 = vpop.sfrf %540
  %p542 = scmp.eq.s32.totalorder %s541, 0
  %p543 = pneg %p542
  %545 = shalt.err (%p543)
  %s546 = scalar_lea.sflag [#allocation3], 12
  %547 = vsyncmov %s546
  %s548 = vpop.sfrf %547
  %p549 = scmp.eq.s32.totalorder %s548, 0
  %p550 = pneg %p549
  %552 = shalt.err (%p550)
  %s553 = scalar_lea.sflag [#allocation3], 13
  %554 = vsyncmov %s553
  %s555 = vpop.sfrf %554
  %p556 = scmp.eq.s32.totalorder %s555, 0
  %p557 = pneg %p556
  %559 = shalt.err (%p557)
  %s560 = scalar_lea.sflag [#allocation3], 14
  %561 = vsyncmov %s560
  %s562 = vpop.sfrf %561
  %p563 = scmp.eq.s32.totalorder %s562, 0
  %p564 = pneg %p563
  %566 = shalt.err (%p564)
  %s567 = scalar_lea.sflag [#allocation3], 15
  %568 = vsyncmov %s567
  %s569 = vpop.sfrf %568
  %p570 = scmp.eq.s32.totalorder %s569, 0
  %p571 = pneg %p570
  %573 = shalt.err (%p571)

</llo_original>
